<compile_context>
chip_gen: v7x
topology: tpu7x:2x2x1
jax: 0.10.0
libtpu: 0.0.40
codegen_flags: <defaults>
</compile_context>

<pallas_src>
import functools
import math

import jax
import jax.numpy as jnp
from jax import lax
from jax.experimental import pallas as pl
from jax.experimental.pallas import tpu as pltpu

_MIB = 1024 * 1024

# dimension_numbers for A @ B.T : contract dim 1 of both operands (native "trans_b"
# MXU form, no relayout of the minor dim).
_CONTRACT_T = (((1,), (1,)), ((), ()))


def _round_up(x, m):
    return (x + m - 1) // m * m


def _pad2d(x, rows, cols):
    return jnp.pad(x, ((0, rows - x.shape[0]), (0, cols - x.shape[1])))


def _tpu_vmem_bytes():
    """Physical VMEM capacity; conservative 64 MiB fallback if the query fails."""
    try:
        info = pltpu.get_tpu_info()
        cap = getattr(info, "vmem_capacity_bytes", None)
        if cap:
            return int(cap)
    except Exception:
        pass
    return 64 * _MIB


# ----------------------------------------------------------------------------
# Prologue kernel (runs once): T = tanh(alpha * E @ W.T), stored in matmul dtype
# ----------------------------------------------------------------------------
def _transform_kernel(e1_ref, e2_ref, w1_ref, w2_ref, t1_ref, t2_ref, *, alpha):
    t1 = jnp.tanh(alpha * lax.dot_general(
        e1_ref[...], w1_ref[...], _CONTRACT_T, preferred_element_type=jnp.float32))
    t2 = jnp.tanh(alpha * lax.dot_general(
        e2_ref[...], w2_ref[...], _CONTRACT_T, preferred_element_type=jnp.float32))
    t1_ref[...] = t1.astype(t1_ref.dtype)
    t2_ref[...] = t2.astype(t2_ref.dtype)


def _transform(e1, e2, w1, w2, alpha, out_dtype, vmem_budget):
    n_pad, d_pad = e1.shape
    tr = next(t for t in (1024, 512, 256, 128) if n_pad % t == 0)
    mm_bytes = jnp.dtype(out_dtype).itemsize
    est = (2 * 2 * tr * d_pad * 4            # e1/e2, double-buffered
           + 2 * 2 * d_pad * d_pad * 4       # w1/w2, double-buffered
           + 2 * 2 * tr * d_pad * mm_bytes)  # t1/t2 outputs, double-buffered
    vmem_limit = int(min(vmem_budget, max(2 * est, 32 * _MIB)))

    kern = functools.partial(_transform_kernel, alpha=alpha)
    return pl.pallas_call(
        kern,
        out_shape=(jax.ShapeDtypeStruct((n_pad, d_pad), out_dtype),
                   jax.ShapeDtypeStruct((n_pad, d_pad), out_dtype)),
        grid=(n_pad // tr,),
        in_specs=[
            pl.BlockSpec((tr, d_pad), lambda i: (i, 0)),
            pl.BlockSpec((tr, d_pad), lambda i: (i, 0)),
            pl.BlockSpec((d_pad, d_pad), lambda i: (0, 0)),
            pl.BlockSpec((d_pad, d_pad), lambda i: (0, 0)),
        ],
        out_specs=(pl.BlockSpec((tr, d_pad), lambda i: (i, 0)),
                   pl.BlockSpec((tr, d_pad), lambda i: (i, 0))),
        compiler_params=pltpu.CompilerParams(
            dimension_semantics=("parallel",),
            vmem_limit_bytes=vmem_limit),
    )(e1, e2, w1, w2)


# ----------------------------------------------------------------------------
# Main kernel: scores + top-k mask + identity for one row tile
# ----------------------------------------------------------------------------
def _adj_kernel(t1_ref, t2_ref, t1r_ref, t2r_ref, o_ref, *, alpha, topk, tm):
    row0 = pl.program_id(0) * tm

    # term1 = T1_rows @ T2.T ; term2 = T2_rows @ T1.T   (bf16/f32 operands, f32 acc)
    term1 = lax.dot_general(t1r_ref[...], t2_ref[...], _CONTRACT_T,
                            preferred_element_type=jnp.float32)
    term2 = lax.dot_general(t2r_ref[...], t1_ref[...], _CONTRACT_T,
                            preferred_element_type=jnp.float32)
    diff = term1 - term2                                   # (tm, n_pad) f32

    # Row-wise top-k threshold on the PRE-tanh diff (tanh monotone -> same selected
    # set; avoids tie inflation from tanh saturating at 1.0).  One XLU reduce + one
    # where per iteration.  Exact f32 ties at positive values (measure-zero) could
    # still select > k entries.
    work = diff
    kth = jnp.full((diff.shape[0], 1), -jnp.inf, dtype=jnp.float32)
    for _ in range(topk):
        kth = jnp.max(work, axis=-1, keepdims=True)        # XLU cross-lane reduce
        work = jnp.where(work >= kth, -jnp.inf, work)      # knock out current max class

    scores = jnp.maximum(jnp.tanh(alpha * diff), 0.0)      # relu(tanh(.)) >= 0
    adj = jnp.where(diff >= kth, scores, 0.0)              # adj * topk-mask
    # Entries below the threshold with nonpositive diff contribute 0 either way, so
    # padded (zero) columns never change the result.

    # adj += eye(N) restricted to this row tile: one full-tile iota vs (tm,1) rows.
    rows_v = row0 + lax.broadcasted_iota(jnp.int32, (tm, 1), 0)
    cols = lax.broadcasted_iota(jnp.int32, adj.shape, 1)
    adj = adj + (cols == rows_v).astype(adj.dtype)

    o_ref[...] = adj


# ----------------------------------------------------------------------------
# Tiling / VMEM heuristics
# ----------------------------------------------------------------------------
def _estimate_vmem(tm, n_pad, d_pad, mm_bytes):
    tables = 2 * 2 * n_pad * d_pad * mm_bytes    # resident T1/T2 (assume 2 buffers each)
    rows = 2 * 2 * tm * d_pad * mm_bytes         # per-tile row blocks, double-buffered
    out = 2 * tm * n_pad * 4                     # output tile, double-buffered
    temps = 5 * tm * n_pad * 4                   # term1/term2/diff/work/adj live set
    return tables + rows + out + temps


def _pick_tm(n_pad, d_pad, mm_bytes, vmem_budget, multi_core):
    cands = [t for t in (512, 256, 128, 64, 32, 16) if n_pad % t == 0]
    for tm in cands:                              # largest tile first
        steps = n_pad // tm
        if _estimate_vmem(tm, n_pad, d_pad, mm_bytes) > vmem_budget:
            continue
        if multi_core and (steps < 2 or steps % 2 != 0):
            continue                              # balanced megacore sharding
        return tm
    for tm in reversed(cands):                    # relax parity, keep VMEM fit
        if _estimate_vmem(tm, n_pad, d_pad, mm_bytes) <= vmem_budget:
            return tm
    return cands[-1]


# ----------------------------------------------------------------------------
# Wrapper
# ----------------------------------------------------------------------------
def adaptive_gnn_adjacency(emb1_w, emb2_w, lin1_w, lin2_w, alpha, topk,
                           matmul_dtype=jnp.bfloat16):
    """Dense weighted adjacency produced by AdaptiveGNN.forward (pre-classifier)."""
    n, d = emb1_w.shape
    topk = int(max(1, min(topk, n)))
    alpha = float(alpha)

    n_pad = _round_up(n, 128)                    # lane-dense output rows/cols
    d_pad = _round_up(max(d, 128), 128)          # lane-dense feature dim

    e1 = _pad2d(emb1_w.astype(jnp.float32), n_pad, d_pad)
    e2 = _pad2d(emb2_w.astype(jnp.float32), n_pad, d_pad)
    w1 = _pad2d(lin1_w.astype(jnp.float32), d_pad, d_pad)
    w2 = _pad2d(lin2_w.astype(jnp.float32), d_pad, d_pad)

    # Generation-aware VMEM budget: 64 MiB physical => v7x-like (2 TCs, clamp ~48 MiB);
    # 128 MiB physical => v5e/v6e-like (1 TC, allow up to ~100 MiB).
    vmem_cap = _tpu_vmem_bytes()
    multi_core = vmem_cap <= 64 * _MIB
    if multi_core:
        budget = int(vmem_cap * 0.75)
    else:
        budget = int(min(100 * _MIB, vmem_cap * 0.78))

    # Hoisted, one-shot transform: T1/T2 in matmul dtype (bf16 by default).
    t1, t2 = _transform(e1, e2, w1, w2, alpha, matmul_dtype, budget)

    mm_bytes = jnp.dtype(matmul_dtype).itemsize
    tm = _pick_tm(n_pad, d_pad, mm_bytes, budget, multi_core)
    grid = (n_pad // tm,)
    est = _estimate_vmem(tm, n_pad, d_pad, mm_bytes)
    vmem_limit = int(min(budget, max(2 * est, 32 * _MIB)))

    kernel = functools.partial(_adj_kernel, alpha=alpha, topk=topk, tm=tm)

    adj_pad = pl.pallas_call(
        kernel,
        out_shape=jax.ShapeDtypeStruct((n_pad, n_pad), jnp.float32),
        grid=grid,
        in_specs=[
            # Resident full tables (constant index_map => no per-step re-DMA), RHS only.
            pl.BlockSpec((n_pad, d_pad), lambda i: (0, 0)),
            pl.BlockSpec((n_pad, d_pad), lambda i: (0, 0)),
            # This tile's rows, delivered by the pipeline (no in-kernel dynamic slicing).
            pl.BlockSpec((tm, d_pad), lambda i: (i, 0)),
            pl.BlockSpec((tm, d_pad), lambda i: (i, 0)),
        ],
        out_specs=pl.BlockSpec((tm, n_pad), lambda i: (i, 0)),
        compiler_params=pltpu.CompilerParams(
            dimension_semantics=("parallel",),
            vmem_limit_bytes=vmem_limit),
    )(t1, t2, t1, t2)

    return adj_pad[:n, :n]


# ----------------------------------------------------------------------------
# Pure-JAX reference for verification
# ----------------------------------------------------------------------------
def reference_forward(emb1_w, emb2_w, lin1_w, lin2_w, alpha, topk):
    t1 = jnp.tanh(alpha * (emb1_w @ lin1_w.T))
    t2 = jnp.tanh(alpha * (emb2_w @ lin2_w.T))
    a = t1 @ t2.T - t2 @ t1.T
    adj = jax.nn.relu(jnp.tanh(alpha * a))
    _, idx = lax.top_k(adj, topk)
    mask = jnp.zeros_like(adj)
    rows = jnp.arange(adj.shape[0])[:, None]
    mask = mask.at[rows, idx].set(1.0)
    adj = adj * mask + jnp.eye(adj.shape[0], dtype=adj.dtype)
    return adj


def xavier_uniform(key, shape):
    fan_in, fan_out = shape[1], shape[0]
    limit = math.sqrt(6.0 / (fan_in + fan_out))
    return jax.random.uniform(key, shape, jnp.float32, -limit, limit)


if __name__ == "__main__":
    num_nodes = 64
    embed_dim = 10
    alpha = 0.5
    topk = 15

    key = jax.random.PRNGKey(0)
    k1, k2, k3, k4 = jax.random.split(key, 4)
    emb1_w = xavier_uniform(k1, (num_nodes, embed_dim))
    emb2_w = xavier_uniform(k2, (num_nodes, embed_dim))
    lin1_w = xavier_uniform(k3, (embed_dim, embed_dim))
    lin2_w = xavier_uniform(k4, (embed_dim, embed_dim))

    ref = reference_forward(emb1_w, emb2_w, lin1_w, lin2_w, alpha, topk)

    # Exact-semantics path (f32 MXU operands) -- verified elementwise vs reference.
    adj_f32 = adaptive_gnn_adjacency(emb1_w, emb2_w, lin1_w, lin2_w, alpha, topk,
                                     matmul_dtype=jnp.float32)
    adj_f32 = jax.block_until_ready(adj_f32)
    assert adj_f32.shape == (num_nodes, num_nodes)
    assert jnp.allclose(adj_f32, ref, atol=1e-5, rtol=1e-5), float(
        jnp.max(jnp.abs(adj_f32 - ref)))

    # Production path (bf16 MXU operands, f32 accumulation).  Top-k membership may flip
    # on near-ties vs the f32 reference (review correctness note), so only structural
    # checks here.
    adj_bf16 = adaptive_gnn_adjacency(emb1_w, emb2_w, lin1_w, lin2_w, alpha, topk)
    adj_bf16 = jax.block_until_ready(adj_bf16)
    assert adj_bf16.shape == (num_nodes, num_nodes)
    assert bool(jnp.all(jnp.isfinite(adj_bf16)))
    assert bool(jnp.all(adj_bf16 >= 0.0))
    assert bool(jnp.allclose(jnp.diag(adj_bf16), 1.0, atol=1e-3))

    print("KERNEL_OK")
</pallas_src>

<mosaic_0001>
module attributes {stable_mosaic.version = 11 : i64} {
  func.func @_transform_kernel(%arg0: i32, %arg1: memref<128x128xf32, #tpu.memory_space<vmem>>, %arg2: memref<128x128xf32, #tpu.memory_space<vmem>>, %arg3: memref<128x128xf32, #tpu.memory_space<vmem>>, %arg4: memref<128x128xf32, #tpu.memory_space<vmem>>, %arg5: memref<128x128xf32, #tpu.memory_space<vmem>>, %arg6: memref<128x128xf32, #tpu.memory_space<vmem>>) attributes {dimension_semantics = [#tpu.dimension_semantics<parallel>], iteration_bounds = array<i64: 1>, scalar_prefetch = 0 : i64, scratch_operands = 0 : i64, tpu.core_type = #tpu.core_type<tc>, window_params = [{transform_indices = @transform_0, window_bounds = array<i64: 128, 128>}, {transform_indices = @transform_1, window_bounds = array<i64: 128, 128>}, {pipeline_mode = #tpu.pipeline_mode<synchronous>, transform_indices = @transform_2, window_bounds = array<i64: 128, 128>}, {pipeline_mode = #tpu.pipeline_mode<synchronous>, transform_indices = @transform_3, window_bounds = array<i64: 128, 128>}, {transform_indices = @transform_4, window_bounds = array<i64: 128, 128>}, {transform_indices = @transform_5, window_bounds = array<i64: 128, 128>}]} {
    %c0 = arith.constant 0 : index
    %c0_0 = arith.constant 0 : index
    %0 = vector.load %arg1[%c0, %c0_0] : memref<128x128xf32, #tpu.memory_space<vmem>>, vector<128x128xf32>
    %c0_1 = arith.constant 0 : index
    %c0_2 = arith.constant 0 : index
    %1 = vector.load %arg3[%c0_1, %c0_2] : memref<128x128xf32, #tpu.memory_space<vmem>>, vector<128x128xf32>
    %cst = arith.constant dense<0.000000e+00> : vector<128x128xf32>
    %2 = tpu.matmul %0, %1, %cst {dimension_numbers = #tpu.dot_dimension_numbers<[1], [1], [0], [0], [0, 0, 1, 0], [], []>} : vector<128x128xf32>, vector<128x128xf32>, vector<128x128xf32> -> vector<128x128xf32>
    %cst_3 = arith.constant 5.000000e-01 : f32
    %3 = vector.broadcast %cst_3 : f32 to vector<128x128xf32>
    %4 = arith.mulf %3, %2 : vector<128x128xf32>
    %5 = math.tanh %4 : vector<128x128xf32>
    %c0_4 = arith.constant 0 : index
    %c0_5 = arith.constant 0 : index
    %6 = vector.load %arg2[%c0_4, %c0_5] : memref<128x128xf32, #tpu.memory_space<vmem>>, vector<128x128xf32>
    %c0_6 = arith.constant 0 : index
    %c0_7 = arith.constant 0 : index
    %7 = vector.load %arg4[%c0_6, %c0_7] : memref<128x128xf32, #tpu.memory_space<vmem>>, vector<128x128xf32>
    %cst_8 = arith.constant dense<0.000000e+00> : vector<128x128xf32>
    %8 = tpu.matmul %6, %7, %cst_8 {dimension_numbers = #tpu.dot_dimension_numbers<[1], [1], [0], [0], [0, 0, 1, 0], [], []>} : vector<128x128xf32>, vector<128x128xf32>, vector<128x128xf32> -> vector<128x128xf32>
    %cst_9 = arith.constant 5.000000e-01 : f32
    %9 = vector.broadcast %cst_9 : f32 to vector<128x128xf32>
    %10 = arith.mulf %9, %8 : vector<128x128xf32>
    %11 = math.tanh %10 : vector<128x128xf32>
    %c0_10 = arith.constant 0 : index
    %c0_11 = arith.constant 0 : index
    %12 = vector.load %arg5[%c0_10, %c0_11] : memref<128x128xf32, #tpu.memory_space<vmem>>, vector<128x128xf32>
    tpu.vector_store %arg5[%c0_10, %c0_11], %5 {strides = array<i32>} : memref<128x128xf32, #tpu.memory_space<vmem>>, vector<128x128xf32>,
    %c0_12 = arith.constant 0 : index
    %c0_13 = arith.constant 0 : index
    %13 = vector.load %arg6[%c0_12, %c0_13] : memref<128x128xf32, #tpu.memory_space<vmem>>, vector<128x128xf32>
    tpu.vector_store %arg6[%c0_12, %c0_13], %11 {strides = array<i32>} : memref<128x128xf32, #tpu.memory_space<vmem>>, vector<128x128xf32>,
    return
  }
  func.func @transform_0(%arg0: i32) -> (i32, i32) {
    %c0_i32 = arith.constant 0 : i32
    %c0_i32_0 = arith.constant 0 : i32
    return %arg0, %c0_i32 : i32, i32
  }
  func.func @transform_1(%arg0: i32) -> (i32, i32) {
    %c0_i32 = arith.constant 0 : i32
    %c0_i32_0 = arith.constant 0 : i32
    return %arg0, %c0_i32 : i32, i32
  }
  func.func @transform_2(%arg0: i32) -> (i32, i32) {
    %c0_i32 = arith.constant 0 : i32
    %c0_i32_0 = arith.constant 0 : i32
    %c0_i32_1 = arith.constant 0 : i32
    return %c0_i32, %c0_i32_0 : i32, i32
  }
  func.func @transform_3(%arg0: i32) -> (i32, i32) {
    %c0_i32 = arith.constant 0 : i32
    %c0_i32_0 = arith.constant 0 : i32
    %c0_i32_1 = arith.constant 0 : i32
    return %c0_i32, %c0_i32_0 : i32, i32
  }
  func.func @transform_4(%arg0: i32) -> (i32, i32) {
    %c0_i32 = arith.constant 0 : i32
    %c0_i32_0 = arith.constant 0 : i32
    return %arg0, %c0_i32 : i32, i32
  }
  func.func @transform_5(%arg0: i32) -> (i32, i32) {
    %c0_i32 = arith.constant 0 : i32
    %c0_i32_0 = arith.constant 0 : i32
    return %arg0, %c0_i32 : i32, i32
  }
}

</mosaic_0001>

<llo_original>
// kernel: tpu_custom_call.1
$region0: #{tpu_custom_call.1}
  #allocation0 [shape = 'u32[]', space=smem, size = 0x4, offset = 0x4, fixed_abs, tag = 'smem constant byte address 0x4 - core index']
  #allocation1 [shape = 'u32[144,128]{1,0:T(1,128)}', space=vmem, size = 0x12000, scoped, tag = 'internal scratch']
  %s0 = inlined_call_operand.hbm [shape: f32[128,128], index: 0, kind: input, shape index: {}]
  %s1 = inlined_call_operand.hbm [shape: f32[128,128], index: 1, kind: input, shape index: {}]
  %s2 = inlined_call_operand.hbm [shape: f32[128,128], index: 2, kind: input, shape index: {}]
  %s3 = inlined_call_operand.hbm [shape: f32[128,128], index: 3, kind: input, shape index: {}]
  %s4 = inlined_call_operand.hbm [shape: f32[128,128], index: 4, kind: output, shape index: {0}]
  %s5 = inlined_call_operand.hbm [shape: f32[128,128], index: 5, kind: output, shape index: {1}]
  %6 = xla_tuple %s4, %s5
  %s7 = sld [smem:[#allocation0]]
  $region50: #{tpu_custom_call.1} parent=0
    _
  %s9 = ssub.s32 1, %s7
  %s10 = scalar_select 0, %s9, %s7
  $region1: #{tpu_custom_call.1} parent=0
    #allocation2 [shape = 'u8[65536]{0}', space=vmem, size = 0x10000, scoped, tag = 'input window, operand 0, single buffered']
    #allocation3 [shape = 's32[1]{0}', space=sflag, size = 0x4, scoped, tag = 'scoped memory for tpu_custom_call.1']
    #allocation4 [shape = 's32[1]{0}', space=sflag, size = 0x4, scoped, tag = 'scoped memory for tpu_custom_call.1']
    #allocation5 [shape = 'u8[65536]{0}', space=vmem, size = 0x10000, scoped, tag = 'input window, operand 1, single buffered']
    #allocation6 [shape = 's32[1]{0}', space=sflag, size = 0x4, scoped, tag = 'scoped memory for tpu_custom_call.1']
    #allocation7 [shape = 'u8[65536]{0}', space=vmem, size = 0x10000, scoped, tag = 'input window, operand 2, single buffered']
    #allocation8 [shape = 'u8[65536]{0}', space=vmem, size = 0x10000, scoped, tag = 'input window, operand 3, single buffered']
    #allocation9 [shape = 's32[1]{0}', space=sflag, size = 0x4, scoped, tag = 'scoped memory for tpu_custom_call.1']
    #allocation10 [shape = 'u8[65536]{0}', space=vmem, size = 0x10000, scoped, tag = 'output window, operand 0, single buffered']
    #allocation11 [shape = 'u8[65536]{0}', space=vmem, size = 0x10000, scoped, tag = 'output window, operand 1, single buffered']
    #allocation12 [shape = 's32[1]{0}', space=sflag, size = 0x4, scoped, tag = 'scoped memory for tpu_custom_call.1']
    %11 = vsyncpa [#allocation3], 0
    %12 = vsyncpa [#allocation6], 0
    %13 = vsyncpa [#allocation9], 0
    %14 = vsyncpa [#allocation4], 0
    %15 = vsyncpa [#allocation12], 0
    // Predicated region
    $region2: #{tpu_custom_call.1} parent=1 // pred_check
      _
    $region3: #{tpu_custom_call.1} parent=1 // pred_check_branch
      %17 = sbr.rel (0) target = $region5
    $region4: #{tpu_custom_call.1} parent=1 // pred_region
      %s19 = ssub.s32 2048, 2048
      %20 = vsyncadd [#allocation3], %s19
      %s21 = sshll.u32 [#allocation2], 4
      %s22 = int_to_ptr.vmem [resolvable:$true] %s21
      %27 = dma.hbm_to_vmem [thread:$0]  %s0, 2048, %s22, [#allocation3], 128, 128, 8
    $region5: #{tpu_custom_call.1} parent=1 // pred_fallthru
      _
    // Predicated region
    $region6: #{tpu_custom_call.1} parent=1 // pred_check
      _
    $region7: #{tpu_custom_call.1} parent=1 // pred_check_branch
      %29 = sbr.rel (0) target = $region9
    $region8: #{tpu_custom_call.1} parent=1 // pred_region
      %s31 = ssub.s32 2048, 2048
      %32 = vsyncadd [#allocation6], %s31
      %s33 = sshll.u32 [#allocation5], 4
      %s34 = int_to_ptr.vmem [resolvable:$true] %s33
      %39 = dma.hbm_to_vmem [thread:$0]  %s1, 2048, %s34, [#allocation6], 128, 128, 8
    $region9: #{tpu_custom_call.1} parent=1 // pred_fallthru
      _
    // Predicated region
    $region10: #{tpu_custom_call.1} parent=1 // pred_check
      _
    $region11: #{tpu_custom_call.1} parent=1 // pred_check_branch
      %41 = sbr.rel (0) target = $region13
    $region12: #{tpu_custom_call.1} parent=1 // pred_region
      %s43 = ssub.s32 2048, 2048
      %44 = vsyncadd [#allocation6], %s43
      %s45 = sshll.u32 [#allocation7], 4
      %s46 = int_to_ptr.vmem [resolvable:$true] %s45
      %51 = dma.hbm_to_vmem [thread:$0]  %s2, 2048, %s46, [#allocation6], 128, 128, 8
    $region13: #{tpu_custom_call.1} parent=1 // pred_fallthru
      _
    // Predicated region
    $region14: #{tpu_custom_call.1} parent=1 // pred_check
      _
    $region15: #{tpu_custom_call.1} parent=1 // pred_check_branch
      %53 = sbr.rel (0) target = $region17
    $region16: #{tpu_custom_call.1} parent=1 // pred_region
      %s55 = ssub.s32 2048, 2048
      %56 = vsyncadd [#allocation9], %s55
      %s57 = sshll.u32 [#allocation8], 4
      %s58 = int_to_ptr.vmem [resolvable:$true] %s57
      %63 = dma.hbm_to_vmem [thread:$0]  %s3, 2048, %s58, [#allocation9], 128, 128, 8
    $region17: #{tpu_custom_call.1} parent=1 // pred_fallthru
      _
    // Predicated region
    $region18: #{tpu_custom_call.1} parent=1 // pred_check
      _
    $region19: #{tpu_custom_call.1} parent=1 // pred_check_branch
      %65 = sbr.rel (0) target = $region21
    $region20: #{tpu_custom_call.1} parent=1 // pred_region
      %66 = dma.done [#allocation3], 2048
    $region21: #{tpu_custom_call.1} parent=1 // pred_fallthru
      _
    // Predicated region
    $region22: #{tpu_custom_call.1} parent=1 // pred_check
      _
    $region23: #{tpu_custom_call.1} parent=1 // pred_check_branch
      %68 = sbr.rel (0) target = $region25
    $region24: #{tpu_custom_call.1} parent=1 // pred_region
      %69 = dma.done [#allocation6], 2048
    $region25: #{tpu_custom_call.1} parent=1 // pred_fallthru
      _
    // Predicated region
    $region26: #{tpu_custom_call.1} parent=1 // pred_check
      _
    $region27: #{tpu_custom_call.1} parent=1 // pred_check_branch
      %71 = sbr.rel (0) target = $region29
    $region28: #{tpu_custom_call.1} parent=1 // pred_region
      %72 = dma.done [#allocation6], 2048
    $region29: #{tpu_custom_call.1} parent=1 // pred_fallthru
      _
    // Predicated region
    $region30: #{tpu_custom_call.1} parent=1 // pred_check
      _
    $region31: #{tpu_custom_call.1} parent=1 // pred_check_branch
      %74 = sbr.rel (0) target = $region33
    $region32: #{tpu_custom_call.1} parent=1 // pred_region
      %75 = dma.done [#allocation9], 2048
    $region33: #{tpu_custom_call.1} parent=1 // pred_fallthru
      _
    %v76 = vld [vmem:[#allocation2] sm:$0xff]
    %v77 = vld [vmem:[#allocation2 + $0x8] sm:$0xff]
    %v78 = vld [vmem:[#allocation2 + $0x10] sm:$0xff]
    %v79 = vld [vmem:[#allocation2 + $0x18] sm:$0xff]
    %v80 = vld [vmem:[#allocation2 + $0x20] sm:$0xff]
    %v81 = vld [vmem:[#allocation2 + $0x28] sm:$0xff]
    %v82 = vld [vmem:[#allocation2 + $0x30] sm:$0xff]
    %v83 = vld [vmem:[#allocation2 + $0x38] sm:$0xff]
    %v84 = vld [vmem:[#allocation2 + $0x40] sm:$0xff]
    %v85 = vld [vmem:[#allocation2 + $0x48] sm:$0xff]
    %v86 = vld [vmem:[#allocation2 + $0x50] sm:$0xff]
    %v87 = vld [vmem:[#allocation2 + $0x58] sm:$0xff]
    %v88 = vld [vmem:[#allocation2 + $0x60] sm:$0xff]
    %v89 = vld [vmem:[#allocation2 + $0x68] sm:$0xff]
    %v90 = vld [vmem:[#allocation2 + $0x70] sm:$0xff]
    %v91 = vld [vmem:[#allocation2 + $0x78] sm:$0xff]
    %v92 = vld [vmem:[#allocation7] sm:$0xff]
    %v93 = vld [vmem:[#allocation7 + $0x8] sm:$0xff]
    %v94 = vld [vmem:[#allocation7 + $0x10] sm:$0xff]
    %v95 = vld [vmem:[#allocation7 + $0x18] sm:$0xff]
    %v96 = vld [vmem:[#allocation7 + $0x20] sm:$0xff]
    %v97 = vld [vmem:[#allocation7 + $0x28] sm:$0xff]
    %v98 = vld [vmem:[#allocation7 + $0x30] sm:$0xff]
    %v99 = vld [vmem:[#allocation7 + $0x38] sm:$0xff]
    %v100 = vld [vmem:[#allocation7 + $0x40] sm:$0xff]
    %v101 = vld [vmem:[#allocation7 + $0x48] sm:$0xff]
    %v102 = vld [vmem:[#allocation7 + $0x50] sm:$0xff]
    %v103 = vld [vmem:[#allocation7 + $0x58] sm:$0xff]
    %v104 = vld [vmem:[#allocation7 + $0x60] sm:$0xff]
    %v105 = vld [vmem:[#allocation7 + $0x68] sm:$0xff]
    %v106 = vld [vmem:[#allocation7 + $0x70] sm:$0xff]
    %v107 = vld [vmem:[#allocation7 + $0x78] sm:$0xff]
    %108 = vmatprep.subr.mxu0 0.0
    %109 = vmatpush1.xpose.msra.mxu0 %v92
    %110 = vmatprep.subr.mxu0 0.0
    %111 = vmatpush1.xpose.msra.mxu0 %v93
    %112 = vmatprep.subr.mxu0 0.0
    %113 = vmatpush1.xpose.msra.mxu0 %v94
    %114 = vmatprep.subr.mxu0 0.0
    %115 = vmatpush1.xpose.msra.mxu0 %v95
    %116 = vmatprep.subr.mxu0 0.0
    %117 = vmatpush1.xpose.msra.mxu0 %v96
    %118 = vmatprep.subr.mxu0 0.0
    %119 = vmatpush1.xpose.msra.mxu0 %v97
    %120 = vmatprep.subr.mxu0 0.0
    %121 = vmatpush1.xpose.msra.mxu0 %v98
    %122 = vmatprep.subr.mxu0 0.0
    %123 = vmatpush1.xpose.msra.mxu0 %v99
    %124 = vmatprep.subr.mxu0 0.0
    %125 = vmatpush1.xpose.msra.mxu0 %v100
    %126 = vmatprep.subr.mxu0 0.0
    %127 = vmatpush1.xpose.msra.mxu0 %v101
    %128 = vmatprep.subr.mxu0 0.0
    %129 = vmatpush1.xpose.msra.mxu0 %v102
    %130 = vmatprep.subr.mxu0 0.0
    %131 = vmatpush1.xpose.msra.mxu0 %v103
    %132 = vmatprep.subr.mxu0 0.0
    %133 = vmatpush1.xpose.msra.mxu0 %v104
    %134 = vmatprep.subr.mxu0 0.0
    %135 = vmatpush1.xpose.msra.mxu0 %v105
    %136 = vmatprep.subr.mxu0 0.0
    %137 = vmatpush1.xpose.msra.mxu0 %v106
    %138 = vmatprep.subr.mxu0 0.0
    %139 = vmatpush1.xpose.msra.mxu0 %v107
    %140 = vmatprep.subr.mxu0 0.0
    %141 = vmatpush1.xpose.msra.mxu0 0.0
    %142 = vmatprep.subr.mxu0 0.0
    %143 = vmatpush1.xpose.msra.mxu0 0.0
    %144 = vmatprep.subr.mxu0 0.0
    %145 = vmatpush1.xpose.msra.mxu0 0.0
    %146 = vmatprep.subr.mxu0 0.0
    %147 = vmatpush1.xpose.msra.mxu0 0.0
    %148 = vmatprep.subr.mxu0 0.0
    %149 = vmatpush1.xpose.msra.mxu0 0.0
    %150 = vmatprep.subr.mxu0 0.0
    %151 = vmatpush1.xpose.msra.mxu0 0.0
    %152 = vmatprep.subr.mxu0 0.0
    %153 = vmatpush1.xpose.msra.mxu0 0.0
    %154 = vmatprep.subr.mxu0 0.0
    %155 = vmatpush1.xpose.msra.mxu0 0.0
    %156 = vmatprep.subr.mxu0 0.0
    %157 = vmatpush1.xpose.msra.mxu0 0.0
    %158 = vmatprep.subr.mxu0 0.0
    %159 = vmatpush1.xpose.msra.mxu0 0.0
    %160 = vmatprep.subr.mxu0 0.0
    %161 = vmatpush1.xpose.msra.mxu0 0.0
    %162 = vmatprep.subr.mxu0 0.0
    %163 = vmatpush1.xpose.msra.mxu0 0.0
    %164 = vmatprep.subr.mxu0 0.0
    %165 = vmatpush1.xpose.msra.mxu0 0.0
    %166 = vmatprep.subr.mxu0 0.0
    %167 = vmatpush1.xpose.msra.mxu0 0.0
    %168 = vmatprep.subr.mxu0 0.0
    %169 = vmatpush1.xpose.msra.mxu0 0.0
    %170 = vmatprep.subr.mxu0 0.0
    %171 = vmatpush1.xpose.msra.mxu0 0.0
    %172 = vmatprep.mubr.f32.mxu0 0.0
    %173 = vmatmul.mubr.f32.gmra.mrb[0].mxu0 %v76
    %v174 = vpop.f32.mrb[0].mxu0
    %v175 = vadd.f32 0.0, %v174
    %v176 = vpop.f32.mrb[0].mxu0
    %177 = vmatprep.mubr.f32.mxu0 0.0
    %178 = vmatmul.mubr.f32.gmra.mrb[0].mxu0 %v77
    %v179 = vpop.f32.mrb[0].mxu0
    %v180 = vadd.f32 0.0, %v179
    %v181 = vpop.f32.mrb[0].mxu0
    %182 = vmatprep.mubr.f32.mxu0 0.0
    %183 = vmatmul.mubr.f32.gmra.mrb[0].mxu0 %v78
    %v184 = vpop.f32.mrb[0].mxu0
    %v185 = vadd.f32 0.0, %v184
    %v186 = vpop.f32.mrb[0].mxu0
    %187 = vmatprep.mubr.f32.mxu0 0.0
    %188 = vmatmul.mubr.f32.gmra.mrb[0].mxu0 %v79
    %v189 = vpop.f32.mrb[0].mxu0
    %v190 = vadd.f32 0.0, %v189
    %v191 = vpop.f32.mrb[0].mxu0
    %192 = vmatprep.mubr.f32.mxu0 0.0
    %193 = vmatmul.mubr.f32.gmra.mrb[0].mxu0 %v80
    %v194 = vpop.f32.mrb[0].mxu0
    %v195 = vadd.f32 0.0, %v194
    %v196 = vpop.f32.mrb[0].mxu0
    %197 = vmatprep.mubr.f32.mxu0 0.0
    %198 = vmatmul.mubr.f32.gmra.mrb[0].mxu0 %v81
    %v199 = vpop.f32.mrb[0].mxu0
    %v200 = vadd.f32 0.0, %v199
    %v201 = vpop.f32.mrb[0].mxu0
    %202 = vmatprep.mubr.f32.mxu0 0.0
    %203 = vmatmul.mubr.f32.gmra.mrb[0].mxu0 %v82
    %v204 = vpop.f32.mrb[0].mxu0
    %v205 = vadd.f32 0.0, %v204
    %v206 = vpop.f32.mrb[0].mxu0
    %207 = vmatprep.mubr.f32.mxu0 0.0
    %208 = vmatmul.mubr.f32.gmra.mrb[0].mxu0 %v83
    %v209 = vpop.f32.mrb[0].mxu0
    %v210 = vadd.f32 0.0, %v209
    %v211 = vpop.f32.mrb[0].mxu0
    %212 = vmatprep.mubr.f32.mxu0 0.0
    %213 = vmatmul.mubr.f32.gmra.mrb[0].mxu0 %v84
    %v214 = vpop.f32.mrb[0].mxu0
    %v215 = vadd.f32 0.0, %v214
    %v216 = vpop.f32.mrb[0].mxu0
    %217 = vmatprep.mubr.f32.mxu0 0.0
    %218 = vmatmul.mubr.f32.gmra.mrb[0].mxu0 %v85
    %v219 = vpop.f32.mrb[0].mxu0
    %v220 = vadd.f32 0.0, %v219
    %v221 = vpop.f32.mrb[0].mxu0
    %222 = vmatprep.mubr.f32.mxu0 0.0
    %223 = vmatmul.mubr.f32.gmra.mrb[0].mxu0 %v86
    %v224 = vpop.f32.mrb[0].mxu0
    %v225 = vadd.f32 0.0, %v224
    %v226 = vpop.f32.mrb[0].mxu0
    %227 = vmatprep.mubr.f32.mxu0 0.0
    %228 = vmatmul.mubr.f32.gmra.mrb[0].mxu0 %v87
    %v229 = vpop.f32.mrb[0].mxu0
    %v230 = vadd.f32 0.0, %v229
    %v231 = vpop.f32.mrb[0].mxu0
    %232 = vmatprep.mubr.f32.mxu0 0.0
    %233 = vmatmul.mubr.f32.gmra.mrb[0].mxu0 %v88
    %v234 = vpop.f32.mrb[0].mxu0
    %v235 = vadd.f32 0.0, %v234
    %v236 = vpop.f32.mrb[0].mxu0
    %237 = vmatprep.mubr.f32.mxu0 0.0
    %238 = vmatmul.mubr.f32.gmra.mrb[0].mxu0 %v89
    %v239 = vpop.f32.mrb[0].mxu0
    %v240 = vadd.f32 0.0, %v239
    %v241 = vpop.f32.mrb[0].mxu0
    %242 = vmatprep.mubr.f32.mxu0 0.0
    %243 = vmatmul.mubr.f32.gmra.mrb[0].mxu0 %v90
    %v244 = vpop.f32.mrb[0].mxu0
    %v245 = vadd.f32 0.0, %v244
    %v246 = vpop.f32.mrb[0].mxu0
    %247 = vmatprep.mubr.f32.mxu0 0.0
    %248 = vmatmul.mubr.f32.gmra.mrb[0].mxu0 %v91
    %v249 = vpop.f32.mrb[0].mxu0
    %v250 = vadd.f32 0.0, %v249
    %v251 = vpop.f32.mrb[0].mxu0
    %252 = vdwg.mxu0
    %v253 = vmul.f32 %v175, 0.5
    %v254 = vmul.f32 %v180, 0.5
    %v255 = vmul.f32 %v185, 0.5
    %v256 = vmul.f32 %v190, 0.5
    %v257 = vmul.f32 %v195, 0.5
    %v258 = vmul.f32 %v200, 0.5
    %v259 = vmul.f32 %v205, 0.5
    %v260 = vmul.f32 %v210, 0.5
    %v261 = vmul.f32 %v215, 0.5
    %v262 = vmul.f32 %v220, 0.5
    %v263 = vmul.f32 %v225, 0.5
    %v264 = vmul.f32 %v230, 0.5
    %v265 = vmul.f32 %v235, 0.5
    %v266 = vmul.f32 %v240, 0.5
    %v267 = vmul.f32 %v245, 0.5
    %v268 = vmul.f32 %v250, 0.5
    %v269 = vtanh.pop %v253
    %v270 = vtanh.pop %v254
    %v271 = vtanh.pop %v255
    %v272 = vtanh.pop %v256
    %v273 = vtanh.pop %v257
    %v274 = vtanh.pop %v258
    %v275 = vtanh.pop %v259
    %v276 = vtanh.pop %v260
    %v277 = vtanh.pop %v261
    %v278 = vtanh.pop %v262
    %v279 = vtanh.pop %v263
    %v280 = vtanh.pop %v264
    %v281 = vtanh.pop %v265
    %v282 = vtanh.pop %v266
    %v283 = vtanh.pop %v267
    %v284 = vtanh.pop %v268
    %v285 = vld [vmem:[#allocation5] sm:$0xff]
    %v286 = vld [vmem:[#allocation5 + $0x8] sm:$0xff]
    %v287 = vld [vmem:[#allocation5 + $0x10] sm:$0xff]
    %v288 = vld [vmem:[#allocation5 + $0x18] sm:$0xff]
    %v289 = vld [vmem:[#allocation5 + $0x20] sm:$0xff]
    %v290 = vld [vmem:[#allocation5 + $0x28] sm:$0xff]
    %v291 = vld [vmem:[#allocation5 + $0x30] sm:$0xff]
    %v292 = vld [vmem:[#allocation5 + $0x38] sm:$0xff]
    %v293 = vld [vmem:[#allocation5 + $0x40] sm:$0xff]
    %v294 = vld [vmem:[#allocation5 + $0x48] sm:$0xff]
    %v295 = vld [vmem:[#allocation5 + $0x50] sm:$0xff]
    %v296 = vld [vmem:[#allocation5 + $0x58] sm:$0xff]
    %v297 = vld [vmem:[#allocation5 + $0x60] sm:$0xff]
    %v298 = vld [vmem:[#allocation5 + $0x68] sm:$0xff]
    %v299 = vld [vmem:[#allocation5 + $0x70] sm:$0xff]
    %v300 = vld [vmem:[#allocation5 + $0x78] sm:$0xff]
    %v301 = vld [vmem:[#allocation8] sm:$0xff]
    %v302 = vld [vmem:[#allocation8 + $0x8] sm:$0xff]
    %v303 = vld [vmem:[#allocation8 + $0x10] sm:$0xff]
    %v304 = vld [vmem:[#allocation8 + $0x18] sm:$0xff]
    %v305 = vld [vmem:[#allocation8 + $0x20] sm:$0xff]
    %v306 = vld [vmem:[#allocation8 + $0x28] sm:$0xff]
    %v307 = vld [vmem:[#allocation8 + $0x30] sm:$0xff]
    %v308 = vld [vmem:[#allocation8 + $0x38] sm:$0xff]
    %v309 = vld [vmem:[#allocation8 + $0x40] sm:$0xff]
    %v310 = vld [vmem:[#allocation8 + $0x48] sm:$0xff]
    %v311 = vld [vmem:[#allocation8 + $0x50] sm:$0xff]
    %v312 = vld [vmem:[#allocation8 + $0x58] sm:$0xff]
    %v313 = vld [vmem:[#allocation8 + $0x60] sm:$0xff]
    %v314 = vld [vmem:[#allocation8 + $0x68] sm:$0xff]
    %v315 = vld [vmem:[#allocation8 + $0x70] sm:$0xff]
    %v316 = vld [vmem:[#allocation8 + $0x78] sm:$0xff]
    %317 = vmatprep.subr.mxu0 0.0
    %318 = vmatpush1.xpose.msra.mxu0 %v301
    %319 = vmatprep.subr.mxu0 0.0
    %320 = vmatpush1.xpose.msra.mxu0 %v302
    %321 = vmatprep.subr.mxu0 0.0
    %322 = vmatpush1.xpose.msra.mxu0 %v303
    %323 = vmatprep.subr.mxu0 0.0
    %324 = vmatpush1.xpose.msra.mxu0 %v304
    %325 = vmatprep.subr.mxu0 0.0
    %326 = vmatpush1.xpose.msra.mxu0 %v305
    %327 = vmatprep.subr.mxu0 0.0
    %328 = vmatpush1.xpose.msra.mxu0 %v306
    %329 = vmatprep.subr.mxu0 0.0
    %330 = vmatpush1.xpose.msra.mxu0 %v307
    %331 = vmatprep.subr.mxu0 0.0
    %332 = vmatpush1.xpose.msra.mxu0 %v308
    %333 = vmatprep.subr.mxu0 0.0
    %334 = vmatpush1.xpose.msra.mxu0 %v309
    %335 = vmatprep.subr.mxu0 0.0
    %336 = vmatpush1.xpose.msra.mxu0 %v310
    %337 = vmatprep.subr.mxu0 0.0
    %338 = vmatpush1.xpose.msra.mxu0 %v311
    %339 = vmatprep.subr.mxu0 0.0
    %340 = vmatpush1.xpose.msra.mxu0 %v312
    %341 = vmatprep.subr.mxu0 0.0
    %342 = vmatpush1.xpose.msra.mxu0 %v313
    %343 = vmatprep.subr.mxu0 0.0
    %344 = vmatpush1.xpose.msra.mxu0 %v314
    %345 = vmatprep.subr.mxu0 0.0
    %346 = vmatpush1.xpose.msra.mxu0 %v315
    %347 = vmatprep.subr.mxu0 0.0
    %348 = vmatpush1.xpose.msra.mxu0 %v316
    %349 = vmatprep.subr.mxu0 0.0
    %350 = vmatpush1.xpose.msra.mxu0 0.0
    %351 = vmatprep.subr.mxu0 0.0
    %352 = vmatpush1.xpose.msra.mxu0 0.0
    %353 = vmatprep.subr.mxu0 0.0
    %354 = vmatpush1.xpose.msra.mxu0 0.0
    %355 = vmatprep.subr.mxu0 0.0
    %356 = vmatpush1.xpose.msra.mxu0 0.0
    %357 = vmatprep.subr.mxu0 0.0
    %358 = vmatpush1.xpose.msra.mxu0 0.0
    %359 = vmatprep.subr.mxu0 0.0
    %360 = vmatpush1.xpose.msra.mxu0 0.0
    %361 = vmatprep.subr.mxu0 0.0
    %362 = vmatpush1.xpose.msra.mxu0 0.0
    %363 = vmatprep.subr.mxu0 0.0
    %364 = vmatpush1.xpose.msra.mxu0 0.0
    %365 = vmatprep.subr.mxu0 0.0
    %366 = vmatpush1.xpose.msra.mxu0 0.0
    %367 = vmatprep.subr.mxu0 0.0
    %368 = vmatpush1.xpose.msra.mxu0 0.0
    %369 = vmatprep.subr.mxu0 0.0
    %370 = vmatpush1.xpose.msra.mxu0 0.0
    %371 = vmatprep.subr.mxu0 0.0
    %372 = vmatpush1.xpose.msra.mxu0 0.0
    %373 = vmatprep.subr.mxu0 0.0
    %374 = vmatpush1.xpose.msra.mxu0 0.0
    %375 = vmatprep.subr.mxu0 0.0
    %376 = vmatpush1.xpose.msra.mxu0 0.0
    %377 = vmatprep.subr.mxu0 0.0
    %378 = vmatpush1.xpose.msra.mxu0 0.0
    %379 = vmatprep.subr.mxu0 0.0
    %380 = vmatpush1.xpose.msra.mxu0 0.0
    %381 = vmatprep.mubr.f32.mxu0 0.0
    %382 = vmatmul.mubr.f32.gmra.mrb[0].mxu0 %v285
    %v383 = vpop.f32.mrb[0].mxu0
    %v384 = vadd.f32 0.0, %v383
    %v385 = vpop.f32.mrb[0].mxu0
    %386 = vmatprep.mubr.f32.mxu0 0.0
    %387 = vmatmul.mubr.f32.gmra.mrb[0].mxu0 %v286
    %v388 = vpop.f32.mrb[0].mxu0
    %v389 = vadd.f32 0.0, %v388
    %v390 = vpop.f32.mrb[0].mxu0
    %391 = vmatprep.mubr.f32.mxu0 0.0
    %392 = vmatmul.mubr.f32.gmra.mrb[0].mxu0 %v287
    %v393 = vpop.f32.mrb[0].mxu0
    %v394 = vadd.f32 0.0, %v393
    %v395 = vpop.f32.mrb[0].mxu0
    %396 = vmatprep.mubr.f32.mxu0 0.0
    %397 = vmatmul.mubr.f32.gmra.mrb[0].mxu0 %v288
    %v398 = vpop.f32.mrb[0].mxu0
    %v399 = vadd.f32 0.0, %v398
    %v400 = vpop.f32.mrb[0].mxu0
    %401 = vmatprep.mubr.f32.mxu0 0.0
    %402 = vmatmul.mubr.f32.gmra.mrb[0].mxu0 %v289
    %v403 = vpop.f32.mrb[0].mxu0
    %v404 = vadd.f32 0.0, %v403
    %v405 = vpop.f32.mrb[0].mxu0
    %406 = vmatprep.mubr.f32.mxu0 0.0
    %407 = vmatmul.mubr.f32.gmra.mrb[0].mxu0 %v290
    %v408 = vpop.f32.mrb[0].mxu0
    %v409 = vadd.f32 0.0, %v408
    %v410 = vpop.f32.mrb[0].mxu0
    %411 = vmatprep.mubr.f32.mxu0 0.0
    %412 = vmatmul.mubr.f32.gmra.mrb[0].mxu0 %v291
    %v413 = vpop.f32.mrb[0].mxu0
    %v414 = vadd.f32 0.0, %v413
    %v415 = vpop.f32.mrb[0].mxu0
    %416 = vmatprep.mubr.f32.mxu0 0.0
    %417 = vmatmul.mubr.f32.gmra.mrb[0].mxu0 %v292
    %v418 = vpop.f32.mrb[0].mxu0
    %v419 = vadd.f32 0.0, %v418
    %v420 = vpop.f32.mrb[0].mxu0
    %421 = vmatprep.mubr.f32.mxu0 0.0
    %422 = vmatmul.mubr.f32.gmra.mrb[0].mxu0 %v293
    %v423 = vpop.f32.mrb[0].mxu0
    %v424 = vadd.f32 0.0, %v423
    %v425 = vpop.f32.mrb[0].mxu0
    %426 = vmatprep.mubr.f32.mxu0 0.0
    %427 = vmatmul.mubr.f32.gmra.mrb[0].mxu0 %v294
    %v428 = vpop.f32.mrb[0].mxu0
    %v429 = vadd.f32 0.0, %v428
    %v430 = vpop.f32.mrb[0].mxu0
    %431 = vmatprep.mubr.f32.mxu0 0.0
    %432 = vmatmul.mubr.f32.gmra.mrb[0].mxu0 %v295
    %v433 = vpop.f32.mrb[0].mxu0
    %v434 = vadd.f32 0.0, %v433
    %v435 = vpop.f32.mrb[0].mxu0
    %436 = vmatprep.mubr.f32.mxu0 0.0
    %437 = vmatmul.mubr.f32.gmra.mrb[0].mxu0 %v296
    %v438 = vpop.f32.mrb[0].mxu0
    %v439 = vadd.f32 0.0, %v438
    %v440 = vpop.f32.mrb[0].mxu0
    %441 = vmatprep.mubr.f32.mxu0 0.0
    %442 = vmatmul.mubr.f32.gmra.mrb[0].mxu0 %v297
    %v443 = vpop.f32.mrb[0].mxu0
    %v444 = vadd.f32 0.0, %v443
    %v445 = vpop.f32.mrb[0].mxu0
    %446 = vmatprep.mubr.f32.mxu0 0.0
    %447 = vmatmul.mubr.f32.gmra.mrb[0].mxu0 %v298
    %v448 = vpop.f32.mrb[0].mxu0
    %v449 = vadd.f32 0.0, %v448
    %v450 = vpop.f32.mrb[0].mxu0
    %451 = vmatprep.mubr.f32.mxu0 0.0
    %452 = vmatmul.mubr.f32.gmra.mrb[0].mxu0 %v299
    %v453 = vpop.f32.mrb[0].mxu0
    %v454 = vadd.f32 0.0, %v453
    %v455 = vpop.f32.mrb[0].mxu0
    %456 = vmatprep.mubr.f32.mxu0 0.0
    %457 = vmatmul.mubr.f32.gmra.mrb[0].mxu0 %v300
    %v458 = vpop.f32.mrb[0].mxu0
    %v459 = vadd.f32 0.0, %v458
    %v460 = vpop.f32.mrb[0].mxu0
    %461 = vdwg.mxu0
    %v462 = vmul.f32 %v384, 0.5
    %v463 = vmul.f32 %v389, 0.5
    %v464 = vmul.f32 %v394, 0.5
    %v465 = vmul.f32 %v399, 0.5
    %v466 = vmul.f32 %v404, 0.5
    %v467 = vmul.f32 %v409, 0.5
    %v468 = vmul.f32 %v414, 0.5
    %v469 = vmul.f32 %v419, 0.5
    %v470 = vmul.f32 %v424, 0.5
    %v471 = vmul.f32 %v429, 0.5
    %v472 = vmul.f32 %v434, 0.5
    %v473 = vmul.f32 %v439, 0.5
    %v474 = vmul.f32 %v444, 0.5
    %v475 = vmul.f32 %v449, 0.5
    %v476 = vmul.f32 %v454, 0.5
    %v477 = vmul.f32 %v459, 0.5
    %v478 = vtanh.pop %v462
    %v479 = vtanh.pop %v463
    %v480 = vtanh.pop %v464
    %v481 = vtanh.pop %v465
    %v482 = vtanh.pop %v466
    %v483 = vtanh.pop %v467
    %v484 = vtanh.pop %v468
    %v485 = vtanh.pop %v469
    %v486 = vtanh.pop %v470
    %v487 = vtanh.pop %v471
    %v488 = vtanh.pop %v472
    %v489 = vtanh.pop %v473
    %v490 = vtanh.pop %v474
    %v491 = vtanh.pop %v475
    %v492 = vtanh.pop %v476
    %v493 = vtanh.pop %v477
    %494 = vst [vmem:[#allocation10] sm:$0xff] %v269
    %495 = vst [vmem:[#allocation10 + $0x8] sm:$0xff] %v270
    %496 = vst [vmem:[#allocation10 + $0x10] sm:$0xff] %v271
    %497 = vst [vmem:[#allocation10 + $0x18] sm:$0xff] %v272
    %498 = vst [vmem:[#allocation10 + $0x20] sm:$0xff] %v273
    %499 = vst [vmem:[#allocation10 + $0x28] sm:$0xff] %v274
    %500 = vst [vmem:[#allocation10 + $0x30] sm:$0xff] %v275
    %501 = vst [vmem:[#allocation10 + $0x38] sm:$0xff] %v276
    %502 = vst [vmem:[#allocation10 + $0x40] sm:$0xff] %v277
    %503 = vst [vmem:[#allocation10 + $0x48] sm:$0xff] %v278
    %504 = vst [vmem:[#allocation10 + $0x50] sm:$0xff] %v279
    %505 = vst [vmem:[#allocation10 + $0x58] sm:$0xff] %v280
    %506 = vst [vmem:[#allocation10 + $0x60] sm:$0xff] %v281
    %507 = vst [vmem:[#allocation10 + $0x68] sm:$0xff] %v282
    %508 = vst [vmem:[#allocation10 + $0x70] sm:$0xff] %v283
    %509 = vst [vmem:[#allocation10 + $0x78] sm:$0xff] %v284
    %510 = vst [vmem:[#allocation11] sm:$0xff] %v478
    %511 = vst [vmem:[#allocation11 + $0x8] sm:$0xff] %v479
    %512 = vst [vmem:[#allocation11 + $0x10] sm:$0xff] %v480
    %513 = vst [vmem:[#allocation11 + $0x18] sm:$0xff] %v481
    %514 = vst [vmem:[#allocation11 + $0x20] sm:$0xff] %v482
    %515 = vst [vmem:[#allocation11 + $0x28] sm:$0xff] %v483
    %516 = vst [vmem:[#allocation11 + $0x30] sm:$0xff] %v484
    %517 = vst [vmem:[#allocation11 + $0x38] sm:$0xff] %v485
    %518 = vst [vmem:[#allocation11 + $0x40] sm:$0xff] %v486
    %519 = vst [vmem:[#allocation11 + $0x48] sm:$0xff] %v487
    %520 = vst [vmem:[#allocation11 + $0x50] sm:$0xff] %v488
    %521 = vst [vmem:[#allocation11 + $0x58] sm:$0xff] %v489
    %522 = vst [vmem:[#allocation11 + $0x60] sm:$0xff] %v490
    %523 = vst [vmem:[#allocation11 + $0x68] sm:$0xff] %v491
    %524 = vst [vmem:[#allocation11 + $0x70] sm:$0xff] %v492
    %525 = vst [vmem:[#allocation11 + $0x78] sm:$0xff] %v493
    // Predicated region
    $region34: #{tpu_custom_call.1} parent=1 // pred_check
      _
    $region35: #{tpu_custom_call.1} parent=1 // pred_check_branch
      %527 = sbr.rel (0) target = $region37
    $region36: #{tpu_custom_call.1} parent=1 // pred_region
      %s529 = ssub.s32 2048, 2048
      %530 = vsyncadd [#allocation4], %s529
      %s531 = sshll.u32 [#allocation10], 4
      %s532 = int_to_ptr.vmem [resolvable:$true] %s531
      %537 = dma.vmem_to_hbm [thread:$0]  %s532, 2048, %s4, [#allocation4], 128, 128, 8
    $region37: #{tpu_custom_call.1} parent=1 // pred_fallthru
      _
    // Predicated region
    $region38: #{tpu_custom_call.1} parent=1 // pred_check
      _
    $region39: #{tpu_custom_call.1} parent=1 // pred_check_branch
      %539 = sbr.rel (0) target = $region41
    $region40: #{tpu_custom_call.1} parent=1 // pred_region
      %s541 = ssub.s32 2048, 2048
      %542 = vsyncadd [#allocation12], %s541
      %s543 = sshll.u32 [#allocation11], 4
      %s544 = int_to_ptr.vmem [resolvable:$true] %s543
      %549 = dma.vmem_to_hbm [thread:$0]  %s544, 2048, %s5, [#allocation12], 128, 128, 8
    $region41: #{tpu_custom_call.1} parent=1 // pred_fallthru
      _
    // Predicated region
    $region42: #{tpu_custom_call.1} parent=1 // pred_check
      _
    $region43: #{tpu_custom_call.1} parent=1 // pred_check_branch
      %551 = sbr.rel (0) target = $region45
    $region44: #{tpu_custom_call.1} parent=1 // pred_region
      %552 = dma.done [#allocation4], 2048
    $region45: #{tpu_custom_call.1} parent=1 // pred_fallthru
      _
    // Predicated region
    $region46: #{tpu_custom_call.1} parent=1 // pred_check
      _
    $region47: #{tpu_custom_call.1} parent=1 // pred_check_branch
      %554 = sbr.rel (0) target = $region49
    $region48: #{tpu_custom_call.1} parent=1 // pred_region
      %555 = dma.done [#allocation12], 2048
    $region49: #{tpu_custom_call.1} parent=1 // pred_fallthru
      _
    %556 = vsyncpa [#allocation3], 1
    %557 = vsyncpa [#allocation6], 1
    %558 = vsyncpa [#allocation9], 1
    %559 = vsyncpa [#allocation4], 1
    %560 = vsyncpa [#allocation12], 1

</llo_original>
